<compile_context>
chip_gen: v7x
topology: tpu7x:2x2x1
jax: 0.10.0
libtpu: 0.0.40
codegen_flags: <defaults>
</compile_context>

<pallas_src>
import math

import jax
import jax.numpy as jnp
import numpy as np
from jax.experimental import pallas as pl
from jax.experimental.pallas import tpu as pltpu

LANE = 128

_VMEM = pl.BlockSpec(memory_space=pltpu.MemorySpace.VMEM)
_SMEM = pl.BlockSpec(memory_space=pltpu.MemorySpace.SMEM)


def _round_up(x, m):
    return (x + m - 1) // m * m


def _smooth_l1(x):
    ax = jnp.abs(x)
    return jnp.where(ax < 1.0, 0.5 * ax * ax, ax - 0.5)


# Packed operand row layout (channels on sublanes, objects on 128-wide lanes):
#   rows  0:2   bin logit-0      [bin1 ch0 ; bin2 ch4]
#   rows  2:4   bin logit-1      [bin1 ch1 ; bin2 ch5]
#   rows  4:6   sin predictions  [ch2 ; ch6]
#   rows  6:8   cos predictions  [ch3 ; ch7]
#   rows  8:10  target bins      [tb1 ; tb2]
#   rows 10:12  target residuals [tr1 ; tr2]
#   rows 12:14  rot mask         [m ; m]
_ROWS = 14


def _rot_loss_kernel(n_ref, x_ref, out_ref):
    x = x_ref[...]                                   # (14, N_pad), zero-padded past n
    l0, l1 = x[0:2, :], x[2:4, :]
    sp, cp = x[4:6, :], x[6:8, :]
    tb, tr = x[8:10, :], x[10:12, :]
    m = x[12:14, :]

    n = n_ref[0]                                     # true row count (runtime scalar)
    n_pad = x.shape[1]
    lane = jax.lax.broadcasted_iota(jnp.int32, (2, n_pad), 1)
    valid = (lane < n).astype(jnp.float32)           # exclude zero-padded lanes only
    inv_n = 1.0 / jnp.maximum(n.astype(jnp.float32), 1.0)

    # --- both bin cross-entropies in one (2, N) slab ------------------------
    # F.cross_entropy(output * mask, target, 'mean'): masked rows keep
    # contributing log(2) (logits zeroed, not excluded).  2-class softplus CE.
    l0m, l1m = l0 * m, l1 * m
    z = jnp.where(tb == 0.0, l1m - l0m, l0m - l1m)
    ce = jnp.maximum(z, 0.0) + jnp.log(1.0 + jnp.exp(-jnp.abs(z)))
    loss_ce = jnp.sum(ce * valid) * inv_n            # = loss_bin1 + loss_bin2

    # --- both sin/cos residual branches in one (2, N) slab -------------------
    # rows whose target bin is nonzero (padding has tb == 0 -> excluded)
    sel = jnp.where(tb != 0.0, valid, 0.0)
    r = _smooth_l1(sp - jnp.sin(tr)) + _smooth_l1(cp - jnp.cos(tr))
    cnt = jnp.sum(sel, axis=1, keepdims=True)        # (2, 1) per-branch row count
    rsum = jnp.sum(r * sel, axis=1, keepdims=True)   # (2, 1)
    res = jnp.where(cnt > 0.0, rsum / jnp.maximum(cnt, 1.0), 0.0)

    out_ref[0] = loss_ce + jnp.sum(res)


def bin_rot_loss(feat, mask, ind, rotbin, rotres):
    """Equivalent of BinRotLoss.forward(output, mask, ind, rotbin, rotres)."""
    B, C, H, W = feat.shape
    K = ind.shape[1]
    n = B * K
    n_pad = _round_up(max(n, 1), LANE)

    # Gather the 8 rot channels at the K object locations from the native NCHW
    # map (reads only B*C*K elements; no NHWC transpose materialized in HBM).
    g = jnp.take_along_axis(feat.reshape(B, C, H * W).astype(jnp.float32),
                            ind[:, None, :].astype(jnp.int32), axis=2)    # (B, C, K)
    p = jnp.transpose(g, (1, 0, 2)).reshape(C, n)                         # (C, B*K)
    tb = jnp.transpose(rotbin.reshape(n, 2)).astype(jnp.float32)          # (2, n)
    tr = jnp.transpose(rotres.reshape(n, 2)).astype(jnp.float32)          # (2, n)
    m = jnp.broadcast_to(mask.reshape(1, n).astype(jnp.float32), (2, n))  # (2, n)

    # Single packed operand, slab ordering chosen for 2-row vector math.
    packed = jnp.concatenate(
        [p[0:1], p[4:5],     # bin logit-0 slab
         p[1:2], p[5:6],     # bin logit-1 slab
         p[2:3], p[6:7],     # sin-pred slab
         p[3:4], p[7:8],     # cos-pred slab
         tb, tr, m],
        axis=0)                                                           # (14, n)
    packed = jnp.pad(packed, ((0, 0), (0, n_pad - n)))                    # (14, n_pad)

    n_arr = jnp.full((1,), n, jnp.int32)   # runtime scalar; no per-n kernel bake-in
    out = pl.pallas_call(
        _rot_loss_kernel,
        out_shape=jax.ShapeDtypeStruct((1,), jnp.float32),
        in_specs=[_SMEM, _VMEM],
        out_specs=_SMEM,
    )(n_arr, packed)
    return out[0]


class BinRotLoss:
    """Thin functional stand-in for the nn.Module."""

    def __call__(self, output, mask, ind, rotbin, rotres):
        return bin_rot_loss(output, mask, ind, rotbin, rotres)


# --------------------------------------------------------------------------
# Pure-numpy reference (mirrors the PyTorch compute_rot_loss exactly)
# --------------------------------------------------------------------------
def _rot_loss_reference(pred, rotbin, rotres, mask):
    pred = np.asarray(pred, np.float64).reshape(-1, 8)
    tb = np.asarray(rotbin, np.float64).reshape(-1, 2)
    tr = np.asarray(rotres, np.float64).reshape(-1, 2)
    m = np.asarray(mask, np.float64).reshape(-1, 1)

    def ce(logits, target):
        logits = logits * m
        mx = logits.max(axis=1, keepdims=True)
        lse = mx[:, 0] + np.log(np.exp(logits - mx).sum(axis=1))
        pick = logits[np.arange(logits.shape[0]), target.astype(np.int64)]
        return float((lse - pick).mean())

    def sl1(x):
        ax = np.abs(x)
        return np.where(ax < 1.0, 0.5 * ax * ax, ax - 0.5)

    loss = ce(pred[:, 0:2], tb[:, 0]) + ce(pred[:, 4:6], tb[:, 1])
    idx1 = tb[:, 0] != 0
    if idx1.any():
        loss += float(sl1(pred[idx1, 2] - np.sin(tr[idx1, 0])).mean())
        loss += float(sl1(pred[idx1, 3] - np.cos(tr[idx1, 0])).mean())
    idx2 = tb[:, 1] != 0
    if idx2.any():
        loss += float(sl1(pred[idx2, 6] - np.sin(tr[idx2, 1])).mean())
        loss += float(sl1(pred[idx2, 7] - np.cos(tr[idx2, 1])).mean())
    return loss


# --------------------------------------------------------------------------
# Example run
# --------------------------------------------------------------------------
if __name__ == "__main__":
    B, K, H, W, C = 2, 8, 16, 16, 8

    k1, k2, k3, k4, k5 = jax.random.split(jax.random.PRNGKey(0), 5)
    feat = jax.random.normal(k1, (B, C, H, W), jnp.float32)               # rot head (8 ch)
    ind = jax.random.randint(k2, (B, K), 0, H * W, jnp.int32)
    rotbin = jax.random.randint(k3, (B, K, 2), 0, 2, jnp.int32).astype(jnp.float32)
    rotres = jax.random.uniform(k4, (B, K, 2), jnp.float32, -math.pi, math.pi)
    mask = (jax.random.uniform(k5, (B, K)) > 0.3).astype(jnp.float32)
    mask = mask.at[:, 0].set(1.0)

    loss_fn = BinRotLoss()
    loss = jax.jit(loss_fn)(feat, mask, ind, rotbin, rotres)
    jax.block_until_ready(loss)

    # correctness check against the PyTorch-equivalent reference (numpy)
    feat_np = np.asarray(feat)
    ind_np = np.asarray(ind)
    pred_np = np.take_along_axis(
        feat_np.reshape(B, C, H * W), ind_np[:, None, :], axis=2)         # (B, C, K)
    pred_np = np.transpose(pred_np, (0, 2, 1))                            # (B, K, C)
    ref = _rot_loss_reference(pred_np, np.asarray(rotbin), np.asarray(rotres),
                              np.asarray(mask))
    np.testing.assert_allclose(float(loss), ref, rtol=1e-3, atol=1e-4)

    print("KERNEL_OK")
</pallas_src>

<mosaic_0001>
module attributes {stable_mosaic.version = 11 : i64} {
  func.func @_rot_loss_kernel(%arg0: memref<1xi32, #tpu.memory_space<smem>>, %arg1: memref<14x128xf32, #tpu.memory_space<vmem>>, %arg2: memref<1xf32, #tpu.memory_space<smem>>) attributes {dimension_semantics = [], scalar_prefetch = 0 : i64, scratch_operands = 0 : i64, tpu.core_type = #tpu.core_type<tc>} {
    %c0 = arith.constant 0 : index
    %c0_0 = arith.constant 0 : index
    %0 = vector.load %arg1[%c0, %c0_0] : memref<14x128xf32, #tpu.memory_space<vmem>>, vector<14x128xf32>
    %1 = vector.extract_strided_slice %0 {offsets = [0, 0], sizes = [2, 128], strides = [1, 1]} : vector<14x128xf32> to vector<2x128xf32>
    %2 = vector.extract_strided_slice %0 {offsets = [2, 0], sizes = [2, 128], strides = [1, 1]} : vector<14x128xf32> to vector<2x128xf32>
    %3 = vector.extract_strided_slice %0 {offsets = [4, 0], sizes = [2, 128], strides = [1, 1]} : vector<14x128xf32> to vector<2x128xf32>
    %4 = vector.extract_strided_slice %0 {offsets = [6, 0], sizes = [2, 128], strides = [1, 1]} : vector<14x128xf32> to vector<2x128xf32>
    %5 = vector.extract_strided_slice %0 {offsets = [8, 0], sizes = [2, 128], strides = [1, 1]} : vector<14x128xf32> to vector<2x128xf32>
    %6 = vector.extract_strided_slice %0 {offsets = [10, 0], sizes = [2, 128], strides = [1, 1]} : vector<14x128xf32> to vector<2x128xf32>
    %7 = vector.extract_strided_slice %0 {offsets = [12, 0], sizes = [2, 128], strides = [1, 1]} : vector<14x128xf32> to vector<2x128xf32>
    %c0_1 = arith.constant 0 : index
    %8 = memref.load %arg0[%c0_1] : memref<1xi32, #tpu.memory_space<smem>>
    %9 = tpu.iota {dimensions = array<i32: 1>} : vector<2x128xi32>
    %10 = vector.broadcast %8 : i32 to vector<2x128xi32>
    %11 = arith.cmpi slt, %9, %10 : vector<2x128xi32>
    %12 = arith.extui %11 : vector<2x128xi1> to vector<2x128xi32>
    %13 = arith.sitofp %12 : vector<2x128xi32> to vector<2x128xf32>
    %14 = arith.sitofp %8 : i32 to f32
    %cst = arith.constant 1.000000e+00 : f32
    %15 = arith.maximumf %14, %cst : f32
    %cst_2 = arith.constant 1.000000e+00 : f32
    %16 = arith.divf %cst_2, %15 : f32
    %17 = arith.mulf %1, %7 : vector<2x128xf32>
    %18 = arith.mulf %2, %7 : vector<2x128xf32>
    %cst_3 = arith.constant 0.000000e+00 : f32
    %19 = vector.broadcast %cst_3 : f32 to vector<2x128xf32>
    %20 = arith.cmpf oeq, %5, %19 : vector<2x128xf32>
    %21 = arith.subf %18, %17 : vector<2x128xf32>
    %22 = arith.subf %17, %18 : vector<2x128xf32>
    %23 = arith.select %20, %21, %22 : vector<2x128xi1>, vector<2x128xf32>
    %cst_4 = arith.constant 0.000000e+00 : f32
    %24 = vector.broadcast %cst_4 : f32 to vector<2x128xf32>
    %25 = arith.maximumf %23, %24 : vector<2x128xf32>
    %26 = math.absf %23 : vector<2x128xf32>
    %cst_5 = arith.constant 0.000000e+00 : f32
    %27 = vector.broadcast %cst_5 : f32 to vector<2x128xf32>
    %28 = arith.subf %27, %26 : vector<2x128xf32>
    %29 = math.exp %28 : vector<2x128xf32>
    %cst_6 = arith.constant 1.000000e+00 : f32
    %30 = vector.broadcast %cst_6 : f32 to vector<2x128xf32>
    %31 = arith.addf %30, %29 : vector<2x128xf32>
    %32 = math.log %31 : vector<2x128xf32>
    %33 = arith.addf %25, %32 : vector<2x128xf32>
    %34 = arith.mulf %33, %13 : vector<2x128xf32>
    %35 = vector.shape_cast %34 : vector<2x128xf32> to vector<1x2x128xf32>
    %cst_7 = arith.constant dense<0.000000e+00> : vector<1xf32>
    %36 = vector.multi_reduction <add>, %35, %cst_7 [1, 2] : vector<1x2x128xf32> to vector<1xf32>
    %37 = vector.shape_cast %36 : vector<1xf32> to vector<1x1x1xf32>
    %38 = vector.extract %37[0, 0, 0] : f32 from vector<1x1x1xf32>
    %39 = arith.mulf %38, %16 : f32
    %cst_8 = arith.constant 0.000000e+00 : f32
    %40 = vector.broadcast %cst_8 : f32 to vector<2x128xf32>
    %41 = arith.cmpf one, %5, %40 : vector<2x128xf32>
    %cst_9 = arith.constant 0.000000e+00 : f32
    %42 = vector.broadcast %cst_9 : f32 to vector<2x128xf32>
    %43 = arith.select %41, %13, %42 : vector<2x128xi1>, vector<2x128xf32>
    %44 = math.sin %6 : vector<2x128xf32>
    %45 = arith.subf %3, %44 : vector<2x128xf32>
    %46 = math.absf %45 : vector<2x128xf32>
    %cst_10 = arith.constant 1.000000e+00 : f32
    %47 = vector.broadcast %cst_10 : f32 to vector<2x128xf32>
    %48 = arith.cmpf olt, %46, %47 : vector<2x128xf32>
    %cst_11 = arith.constant 5.000000e-01 : f32
    %49 = vector.broadcast %cst_11 : f32 to vector<2x128xf32>
    %50 = arith.mulf %49, %46 : vector<2x128xf32>
    %51 = arith.mulf %50, %46 : vector<2x128xf32>
    %cst_12 = arith.constant 5.000000e-01 : f32
    %52 = vector.broadcast %cst_12 : f32 to vector<2x128xf32>
    %53 = arith.subf %46, %52 : vector<2x128xf32>
    %54 = arith.select %48, %51, %53 : vector<2x128xi1>, vector<2x128xf32>
    %55 = math.cos %6 : vector<2x128xf32>
    %56 = arith.subf %4, %55 : vector<2x128xf32>
    %57 = math.absf %56 : vector<2x128xf32>
    %cst_13 = arith.constant 1.000000e+00 : f32
    %58 = vector.broadcast %cst_13 : f32 to vector<2x128xf32>
    %59 = arith.cmpf olt, %57, %58 : vector<2x128xf32>
    %cst_14 = arith.constant 5.000000e-01 : f32
    %60 = vector.broadcast %cst_14 : f32 to vector<2x128xf32>
    %61 = arith.mulf %60, %57 : vector<2x128xf32>
    %62 = arith.mulf %61, %57 : vector<2x128xf32>
    %cst_15 = arith.constant 5.000000e-01 : f32
    %63 = vector.broadcast %cst_15 : f32 to vector<2x128xf32>
    %64 = arith.subf %57, %63 : vector<2x128xf32>
    %65 = arith.select %59, %62, %64 : vector<2x128xi1>, vector<2x128xf32>
    %66 = arith.addf %54, %65 : vector<2x128xf32>
    %cst_16 = arith.constant dense<0.000000e+00> : vector<2xf32>
    %67 = vector.multi_reduction <add>, %43, %cst_16 [1] : vector<2x128xf32> to vector<2xf32>
    %68 = vector.shape_cast %67 : vector<2xf32> to vector<2x1xf32>
    %69 = arith.mulf %66, %43 : vector<2x128xf32>
    %cst_17 = arith.constant dense<0.000000e+00> : vector<2xf32>
    %70 = vector.multi_reduction <add>, %69, %cst_17 [1] : vector<2x128xf32> to vector<2xf32>
    %71 = vector.shape_cast %70 : vector<2xf32> to vector<2x1xf32>
    %cst_18 = arith.constant 0.000000e+00 : f32
    %72 = vector.broadcast %cst_18 : f32 to vector<2x1xf32>
    %73 = arith.cmpf ogt, %68, %72 : vector<2x1xf32>
    %cst_19 = arith.constant 1.000000e+00 : f32
    %74 = vector.broadcast %cst_19 : f32 to vector<2x1xf32>
    %75 = arith.maximumf %68, %74 : vector<2x1xf32>
    %76 = arith.divf %71, %75 : vector<2x1xf32>
    %cst_20 = arith.constant 0.000000e+00 : f32
    %77 = vector.broadcast %cst_20 : f32 to vector<2x1xf32>
    %78 = arith.select %73, %76, %77 : vector<2x1xi1>, vector<2x1xf32>
    %79 = vector.shape_cast %78 : vector<2x1xf32> to vector<1x2x1xf32>
    %cst_21 = arith.constant dense<0.000000e+00> : vector<1xf32>
    %80 = vector.multi_reduction <add>, %79, %cst_21 [1, 2] : vector<1x2x1xf32> to vector<1xf32>
    %81 = vector.shape_cast %80 : vector<1xf32> to vector<1x1x1xf32>
    %82 = vector.extract %81[0, 0, 0] : f32 from vector<1x1x1xf32>
    %83 = arith.addf %39, %82 : f32
    %c0_22 = arith.constant 0 : index
    %84 = memref.load %arg2[%c0_22] : memref<1xf32, #tpu.memory_space<smem>>
    memref.store %83, %arg2[%c0_22] : memref<1xf32, #tpu.memory_space<smem>>
    return
  }
}

</mosaic_0001>

<llo_original>
// kernel: _unnamed_function_.1
$region0: #{_unnamed_function_.1}
  #allocation0 [shape = 'u32[]', space=smem, size = 0x4, offset = 0x4, fixed_abs, tag = 'smem constant byte address 0x4 - core index']
  #allocation1 [shape = 'u32[144,128]{1,0:T(1,128)}', space=vmem, size = 0x12000, scoped, tag = 'internal scratch']
  #allocation2 [shape = 's32[1]{0:T(128)S(6)}', space=smem, size = 0x200, scoped, tag = 'scoped memory for _unnamed_function_.1']
  %s0 = inlined_call_operand.<no memory space> [shape: s32[1], index: 0, kind: input, shape index: {}]
  %s1 = inlined_call_operand.vmem [shape: f32[14,128], index: 1, kind: input, shape index: {}]
  %s2 = inlined_call_operand.hbm [shape: f32[1], index: 2, kind: output, shape index: {}]
  %s3 = sld [smem:[#allocation0]]
  $region18: #{_unnamed_function_.1} parent=0
    _
  %s5 = ssub.s32 1, %s3
  %s6 = scalar_select 0, %s5, %s3
  %7 = sst [smem:[#allocation2]] %s0
  $region1: #{_unnamed_function_.1} parent=0
    #allocation3 [shape = 'u8[512]{0}', space=smem, size = 0x200, scoped, tag = 'output window, operand 0, single buffered']
    #allocation4 [shape = 's32[1]{0}', space=sflag, size = 0x4, scoped, tag = 'scoped memory for _unnamed_function_.1']
    %8 = vsyncpa [#allocation4], 0
    // Predicated region
    $region2: #{_unnamed_function_.1} parent=1 // pred_check
      _
    $region3: #{_unnamed_function_.1} parent=1 // pred_check_branch
      %10 = sbr.rel (0) target = $region5
    $region4: #{_unnamed_function_.1} parent=1 // pred_region
      _
    $region5: #{_unnamed_function_.1} parent=1 // pred_fallthru
      _
    // Predicated region
    $region6: #{_unnamed_function_.1} parent=1 // pred_check
      _
    $region7: #{_unnamed_function_.1} parent=1 // pred_check_branch
      %12 = sbr.rel (0) target = $region9
    $region8: #{_unnamed_function_.1} parent=1 // pred_region
      _
    $region9: #{_unnamed_function_.1} parent=1 // pred_fallthru
      _
    %v13 = vld [vmem:[%s1] sm:$0xff]
    %v14 = vld [vmem:[%s1 + $0x8] sm:$0x3f]
    %s15 = sld [smem:[#allocation2]]
    %v16 = vlaneseq
    %v17 = vand.u32 %v16, 127
    %v18 = vstv %s15
    %vm19 = vcmp.lt.s32.totalorder %v17, %v18
    %v20 = vsel %vm19, 1, 0
    %v21 = vcvt.s32.f32 %v20
    %s22 = scvt.s32.f32 %s15
    %s23 = smax.f32 %s22, 1.0
    %v24 = vstv %s23
    %v25 = vrcp.pop %v24
    %s26 = vtos %v25
    %v28 = vrot.slane %v14, 4
    %v30 = vmul.f32 %v13, %v28
    %v31 = vrot.slane %v14, 2
    %v33 = vmul.f32 %v13, %v31
    %vm34 = vcmp.eq.f32.partialorder %v14, 0.0
    %v36 = vrot.slane %v30, 6
    %v38 = vsub.f32 %v33, %v36
    %v40 = vrot.slane %v33, 2
    %v42 = vsub.f32 %v30, %v40
    %v44 = vrot.slane %v38, 2
    %v46 = vsel %vm34, %v44, %v42
    %v47 = vmax.f32 %v46, 0.0
    %v48 = vand.u32 2147483647, %v46
    %v49 = vsub.f32 0.0, %v48
    %v50 = vmul.f32 %v49, 1.442695
    %v51 = vpow.pop %v50
    %v52 = vadd.f32 %v51, 1.0
    %v53 = vlog2.pop %v52
    %v54 = vmul.f32 %v53, 0.6931472
    %v55 = vadd.f32 %v47, %v54
    %v56 = vmul.f32 %v55, %v21
    %vm57 = vcmask 1041408
    %v58 = vsel %vm57, %v56, 0.0
    %59 = vadd.xlane.f32.xlu0 %v58
    %v60 = vpop.xlane.xlu0 %59
    %v61 = vrot.slane %v60, 4
    %v62 = vadd.f32 %v60, %v61
    %v63 = vrot.slane %v62, 2
    %v64 = vadd.f32 %v62, %v63
    %v65 = vrot.slane %v64, 1
    %v66 = vadd.f32 %v64, %v65
    %s67 = vtos %v66
    %s68 = smul.f32 %s67, %s26
    %vm69 = vcmp.ne.f32.partialorder %v14, 0.0
    %v70 = vsel %vm69, %v21, 0.0
    %v71 = vand.u32 2147483647, %v14
    %vm72 = vcmp.le.f32.partialorder %v71, 0.7853982
    %vm73 = vcmp.lt.s32.totalorder %v14, 0
    %v74 = vand.u32 %v14, 2139095040
    %v75 = vshrl.u32 %v74, 23
    %v76 = vsub.s32 %v75, 127
    %v77 = vand.u32 2147483647, %v14
    %v78 = vand.u32 %v77, 8388607
    %v79 = vor.u32 %v78, 8388608
    %v80 = vsub.s32 0, %v79
    %v81 = vadd.s32 %v76, 1
    %vm82 = vcmp.gt.s32.totalorder %v81, 0
    %v83 = vsel %vm82, %v81, 0
    %v84 = vshrl.u32 %v83, 5
    %v85 = vand.u32 %v83, 31
    %v86 = vsub.s32 32, %v85
    %v87 = vshrl.u32 683565275, %v86
    %v88 = vshll.u32 683565275, %v85
    %v89 = vshrl.u32 2475754826, %v86
    %v90 = vor.u32 %v88, %v89
    %v91 = vshll.u32 2475754826, %v85
    %v92 = vshrl.u32 2131351028, %v86
    %v93 = vor.u32 %v91, %v92
    %v94 = vshll.u32 2131351028, %v85
    %v95 = vshrl.u32 2102212464, %v86
    %v96 = vor.u32 %v94, %v95
    %v97 = vshll.u32 2102212464, %v85
    %v98 = vshrl.u32 920167782, %v86
    %v99 = vor.u32 %v97, %v98
    %v100 = vshll.u32 920167782, %v85
    %v101 = vshrl.u32 1326507024, %v86
    %v102 = vor.u32 %v100, %v101
    %vm103 = vcmp.lt.s32.totalorder %v84, 1
    %vm104 = vcmp.lt.s32.totalorder %v84, 2
    %vm105 = vcmp.lt.s32.totalorder %v84, 3
    %vm106 = vcmp.lt.s32.totalorder %v84, 4
    %v107 = vsel %vm103, %v87, %v90
    %v108 = vsel %vm106, %v96, 2102212464
    %v109 = vsel %vm105, %v93, %v108
    %v110 = vsel %vm104, %v107, %v109
    %v111 = vsel %vm103, %v90, %v93
    %v112 = vsel %vm106, %v99, 920167782
    %v113 = vsel %vm105, %v96, %v112
    %v114 = vsel %vm104, %v111, %v113
    %v115 = vsel %vm103, %v93, %v96
    %v116 = vsel %vm106, %v102, 1326507024
    %v117 = vsel %vm105, %v99, %v116
    %v118 = vsel %vm104, %v115, %v117
    %v119 = vshll.u32 %v79, 8
    %v120 = vmul.u32.u64.compose %v119, %v118
    %v121 = vextract.low.u32 %v120
    %v122 = vextract.high.u32 %v120
    %v123 = vmul.u32.u64.compose %v119, %v114
    %v124 = vextract.low.u32 %v123
    %v125 = vextract.high.u32 %v123
    %v126 = vmul.u32 %v119, %v110
    %v127 = vadd.s32 %v122, %v124
    %vm128 = vc.u32 %v122, %v124
    %v129 = vadd.s32 %v125, 1
    %v130 = vsel %vm128, %v129, %v125
    %v131 = vadd.s32 %v126, %v130
    %v132 = vadd.s32 %v131, 536870912
    %v133 = vshrl.u32 %v132, 30
    %v134 = vshll.u32 %v133, 30
    %v135 = vsub.s32 %v131, %v134
    %vm136 = vcmp.lt.s32.totalorder %v135, 0
    %v137 = vsub.s32 0, %v135
    %v138 = vsel %vm136, %v137, %v135
    %v139 = vclz %v138
    %v140 = vsub.s32 %v139, 2
    %vm141 = vcmp.gt.s32.totalorder 0, %v140
    %v142 = vsel %vm141, 0, %v140
    %v143 = vsub.s32 32, %v142
    %v144 = vshll.u32 %v135, %v142
    %v145 = vshrl.u32 %v127, %v143
    %v146 = vor.u32 %v144, %v145
    %v147 = vsub.s32 4294967266, %v142
    %v148 = vadd.s32 %v147, 127
    %v149 = vshll.u32 %v148, 23
    %v150 = vor.u32 4788187, %v149
    %v151 = vand.u32 2147483647, %v150
    %v153 = vcvt.s32.f32 %v146
    %v154 = vmul.f32 %v153, %v151
    %v155 = vxor.u32 %v154, 2147483648
    %v156 = vsel %vm73, %v155, %v154
    %v157 = vsub.s32 4, %v133
    %v158 = vsel %vm73, %v157, %v133
    %v159 = vsel %vm72, %v14, %v156
    %v160 = vsel %vm72, 0, %v158
    %v161 = vcosq.f32.pop %v159
    %v162 = vsinq.f32.pop %v159
    %vm163 = vweird.f32 %v14
    %v164 = vadd.s32 %v160, 3
    %v165 = vand.u32 %v164, 3
    %vm166 = vcmp.lt.s32.totalorder %v165, 2
    %vm167 = vcmp.eq.s32.totalorder %v165, 0
    %v168 = vxor.u32 %v162, 2147483648
    %v169 = vsel %vm167, %v161, %v168
    %vm170 = vcmp.eq.s32.totalorder %v165, 2
    %v171 = vxor.u32 %v161, 2147483648
    %v172 = vsel %vm170, %v171, %v162
    %v173 = vsel %vm166, %v169, %v172
    %v174 = vsel %vm163, nan, %v173
    %v176 = vrot.slane %v174, 6
    %v178 = vsub.f32 %v13, %v176
    %v179 = vand.u32 2147483647, %v178
    %vm180 = vcmp.lt.f32.partialorder %v179, 1.0
    %v181 = vmul.f32 %v179, 0.5
    %v182 = vmul.f32 %v181, %v179
    %v183 = vsub.f32 %v179, 0.5
    %v184 = vsel %vm180, %v182, %v183
    %v185 = vand.u32 2147483647, %v14
    %vm186 = vcmp.le.f32.partialorder %v185, 0.7853982
    %vm187 = vcmp.lt.s32.totalorder %v14, 0
    %v188 = vand.u32 %v14, 2139095040
    %v189 = vshrl.u32 %v188, 23
    %v190 = vsub.s32 %v189, 127
    %v191 = vand.u32 2147483647, %v14
    %v192 = vand.u32 %v191, 8388607
    %v193 = vor.u32 %v192, 8388608
    %v194 = vsub.s32 0, %v193
    %v195 = vadd.s32 %v190, 1
    %vm196 = vcmp.gt.s32.totalorder %v195, 0
    %v197 = vsel %vm196, %v195, 0
    %v198 = vshrl.u32 %v197, 5
    %v199 = vand.u32 %v197, 31
    %v200 = vsub.s32 32, %v199
    %v201 = vshrl.u32 683565275, %v200
    %v202 = vshll.u32 683565275, %v199
    %v203 = vshrl.u32 2475754826, %v200
    %v204 = vor.u32 %v202, %v203
    %v205 = vshll.u32 2475754826, %v199
    %v206 = vshrl.u32 2131351028, %v200
    %v207 = vor.u32 %v205, %v206
    %v208 = vshll.u32 2131351028, %v199
    %v209 = vshrl.u32 2102212464, %v200
    %v210 = vor.u32 %v208, %v209
    %v211 = vshll.u32 2102212464, %v199
    %v212 = vshrl.u32 920167782, %v200
    %v213 = vor.u32 %v211, %v212
    %v214 = vshll.u32 920167782, %v199
    %v215 = vshrl.u32 1326507024, %v200
    %v216 = vor.u32 %v214, %v215
    %vm217 = vcmp.lt.s32.totalorder %v198, 1
    %vm218 = vcmp.lt.s32.totalorder %v198, 2
    %vm219 = vcmp.lt.s32.totalorder %v198, 3
    %vm220 = vcmp.lt.s32.totalorder %v198, 4
    %v221 = vsel %vm217, %v201, %v204
    %v222 = vsel %vm220, %v210, 2102212464
    %v223 = vsel %vm219, %v207, %v222
    %v224 = vsel %vm218, %v221, %v223
    %v225 = vsel %vm217, %v204, %v207
    %v226 = vsel %vm220, %v213, 920167782
    %v227 = vsel %vm219, %v210, %v226
    %v228 = vsel %vm218, %v225, %v227
    %v229 = vsel %vm217, %v207, %v210
    %v230 = vsel %vm220, %v216, 1326507024
    %v231 = vsel %vm219, %v213, %v230
    %v232 = vsel %vm218, %v229, %v231
    %v233 = vshll.u32 %v193, 8
    %v234 = vmul.u32.u64.compose %v233, %v232
    %v235 = vextract.low.u32 %v234
    %v236 = vextract.high.u32 %v234
    %v237 = vmul.u32.u64.compose %v233, %v228
    %v238 = vextract.low.u32 %v237
    %v239 = vextract.high.u32 %v237
    %v240 = vmul.u32 %v233, %v224
    %v241 = vadd.s32 %v236, %v238
    %vm242 = vc.u32 %v236, %v238
    %v243 = vadd.s32 %v239, 1
    %v244 = vsel %vm242, %v243, %v239
    %v245 = vadd.s32 %v240, %v244
    %v246 = vadd.s32 %v245, 536870912
    %v247 = vshrl.u32 %v246, 30
    %v248 = vshll.u32 %v247, 30
    %v249 = vsub.s32 %v245, %v248
    %vm250 = vcmp.lt.s32.totalorder %v249, 0
    %v251 = vsub.s32 0, %v249
    %v252 = vsel %vm250, %v251, %v249
    %v253 = vclz %v252
    %v254 = vsub.s32 %v253, 2
    %vm255 = vcmp.gt.s32.totalorder 0, %v254
    %v256 = vsel %vm255, 0, %v254
    %v257 = vsub.s32 32, %v256
    %v258 = vshll.u32 %v249, %v256
    %v259 = vshrl.u32 %v241, %v257
    %v260 = vor.u32 %v258, %v259
    %v261 = vsub.s32 4294967266, %v256
    %v262 = vadd.s32 %v261, 127
    %v263 = vshll.u32 %v262, 23
    %v264 = vor.u32 4788187, %v263
    %v265 = vand.u32 2147483647, %v264
    %v267 = vcvt.s32.f32 %v260
    %v268 = vmul.f32 %v267, %v265
    %v269 = vxor.u32 %v268, 2147483648
    %v270 = vsel %vm187, %v269, %v268
    %v271 = vsub.s32 4, %v247
    %v272 = vsel %vm187, %v271, %v247
    %v273 = vsel %vm186, %v14, %v270
    %v274 = vsel %vm186, 0, %v272
    %v275 = vcosq.f32.pop %v273
    %v276 = vsinq.f32.pop %v273
    %vm277 = vweird.f32 %v14
    %v278 = vand.u32 %v274, 3
    %vm279 = vcmp.lt.s32.totalorder %v278, 2
    %vm280 = vcmp.eq.s32.totalorder %v278, 0
    %v281 = vxor.u32 %v276, 2147483648
    %v282 = vsel %vm280, %v275, %v281
    %vm283 = vcmp.eq.s32.totalorder %v278, 2
    %v284 = vxor.u32 %v275, 2147483648
    %v285 = vsel %vm283, %v284, %v276
    %v286 = vsel %vm279, %v282, %v285
    %v287 = vsel %vm277, nan, %v286
    %v289 = vrot.slane %v287, 4
    %v291 = vsub.f32 %v13, %v289
    %v292 = vand.u32 2147483647, %v291
    %vm293 = vcmp.lt.f32.partialorder %v292, 1.0
    %v294 = vmul.f32 %v292, 0.5
    %v295 = vmul.f32 %v294, %v292
    %v296 = vsub.f32 %v292, 0.5
    %v297 = vsel %vm293, %v295, %v296
    %v299 = vrot.slane %v297, 2
    %v301 = vadd.f32 %v184, %v299
    %v302 = vsel %vm57, %v70, 0.0
    %303 = vadd.xlane.f32.xlu0 %v302
    %v304 = vpop.xlane.xlu0 %303
    %v306 = vrot.slane %v70, 4
    %v308 = vmul.f32 %v301, %v306
    %vm309 = vcmask 1045508
    %v310 = vsel %vm309, %v308, 0.0
    %311 = vadd.xlane.f32.xlu0 %v310
    %v312 = vpop.xlane.xlu0 %311
    %vm313 = vcmp.gt.f32.partialorder %v304, 0.0
    %v314 = vmax.f32 %v304, 1.0
    %v316 = vrot.slane %v314, 4
    %v318 = vrcp.pop %v316
    %v319 = vmul.f32 %v312, %v318
    %v321 = vrot.slane %v319, 4
    %v323 = vsel %vm313, %v321, 0.0
    %vm324 = vcmask 1024
    %v325 = vsel %vm324, %v323, 0.0
    %326 = vadd.xlane.f32.xlu0 %v325
    %v327 = vpop.xlane.xlu0 %326
    %v328 = vrot.slane %v327, 4
    %v329 = vadd.f32 %v327, %v328
    %v330 = vrot.slane %v329, 2
    %v331 = vadd.f32 %v329, %v330
    %v332 = vrot.slane %v331, 1
    %v333 = vadd.f32 %v331, %v332
    %s334 = vtos %v333
    %s335 = sadd.f32 %s68, %s334
    %s336 = scalar_lea.smem [#allocation3], 0
    %337 = sst [smem:[%s336]] %s335
    // Predicated region
    $region10: #{_unnamed_function_.1} parent=1 // pred_check
      _
    $region11: #{_unnamed_function_.1} parent=1 // pred_check_branch
      %339 = sbr.rel (0) target = $region13
    $region12: #{_unnamed_function_.1} parent=1 // pred_region
      %s341 = ssub.s32 16, 16
      %342 = vsyncadd [#allocation4], %s341
      %345 = dma.smem_to_hbm [#allocation3], 16, %s2, [#allocation4]
    $region13: #{_unnamed_function_.1} parent=1 // pred_fallthru
      _
    // Predicated region
    $region14: #{_unnamed_function_.1} parent=1 // pred_check
      _
    $region15: #{_unnamed_function_.1} parent=1 // pred_check_branch
      %347 = sbr.rel (0) target = $region17
    $region16: #{_unnamed_function_.1} parent=1 // pred_region
      %348 = dma.done [#allocation4], 16
    $region17: #{_unnamed_function_.1} parent=1 // pred_fallthru
      _
    %349 = sfence
    %350 = vsyncpa [#allocation4], 1

</llo_original>
